<compile_context>
chip_gen: v7x
topology: tpu7x:2x2x1
jax: 0.10.0
libtpu: 0.0.40
codegen_flags: <defaults>
</compile_context>

<pallas_src>
import math

import jax
import jax.numpy as jnp
from jax.experimental import pallas as pl
from jax.experimental.pallas import tpu as pltpu

D_MODEL = 32
MAX_LEN = 64
DROPOUT_P = 0.1        # eval mode -> identity

LANE = 128             # lane-dense last dim for the flattened slab
SINGLE_BLOCK_MAX_ROWS = 512   # <= 256 KiB/operand: single VMEM block, no grid
TILE_ROWS = 512        # rows per grid step for large inputs
                       # (v6e/v5e: can go bigger + vmem_limit_bytes;
                       #  v7x: halve it — 64 MiB VMEM per TensorCore)


# ---------------------------------------------------------------------------
# Kernels
# ---------------------------------------------------------------------------
def _pe_add_whole_kernel(x_ref, pe_ref, o_ref):
    """No-grid path: x_ref/o_ref are (rows, 128); pe_ref is the full flat pe.

    The first `rows` rows of the flat pe buffer correspond exactly to
    pe[:T] broadcast over batch, so a static (free) sub-view suffices.
    """
    rows = x_ref.shape[0]
    o_ref[...] = x_ref[...] + pe_ref[0:rows, :]
    # TODO(synk): nn.Dropout(p=0.1) omitted -- identity in eval mode.  Training
    # would need pltpu.prng_seed + pltpu.stateful_bernoulli keep-mask here.


def _pe_add_tile_kernel(x_ref, pe_ref, o_ref):
    """Tiled path: all refs are the same (TILE_ROWS, 128) block."""
    o_ref[...] = x_ref[...] + pe_ref[...]


# ---------------------------------------------------------------------------
# Buffers ("module init")
# ---------------------------------------------------------------------------
def make_pe_table(max_len, d_model, dtype=jnp.float32):
    """Deterministic sin/cos buffer, exactly as in the PyTorch module: (L,1,E)."""
    position = jnp.arange(max_len, dtype=jnp.float32)[:, None]          # (L, 1)
    div_term = jnp.exp(jnp.arange(0, d_model, 2, dtype=jnp.float32)
                       * (-math.log(10000.0) / d_model))                # (ceil(E/2),)
    angles = position * div_term                                        # (L, ceil(E/2))
    pe = jnp.zeros((max_len, d_model), jnp.float32)
    pe = pe.at[:, 0::2].set(jnp.sin(angles))
    pe = pe.at[:, 1::2].set(jnp.cos(angles)[:, : d_model // 2])         # safe for odd E
    return pe[:, None, :].astype(dtype)                                 # (L, 1, E)


def flatten_pe_for_batch(pe, batch):
    """Pre-broadcast pe over the known batch and flatten lane-dense.

    Done once at module init (the buffer is constant).  Returns
    (max_len*batch*d_model // 128, 128); its first T*batch*d_model/128 rows
    are exactly pe[:T] broadcast over batch, flattened row-major.
    """
    max_len, _, d_model = pe.shape
    total = max_len * batch * d_model
    if total % LANE != 0:
        raise ValueError("max_len*batch*d_model must be a multiple of 128 "
                         "for the lane-dense layout")
    pe_b = jnp.broadcast_to(pe, (max_len, batch, d_model))
    return pe_b.reshape(total // LANE, LANE)


# ---------------------------------------------------------------------------
# Forward wrapper
# ---------------------------------------------------------------------------
@jax.jit
def positional_encoding(x, pe_flat):
    """x: (T, B, E) float32.  pe_flat: flatten_pe_for_batch(pe, B).  -> (T, B, E)."""
    T, B, E = x.shape
    total = T * B * E
    if total % LANE != 0:
        raise ValueError("T*B*E must be a multiple of 128 for the lane-dense layout")
    rows = total // LANE
    if rows > pe_flat.shape[0]:
        raise ValueError("sequence length exceeds max_len of the pe buffer")

    x_flat = x.reshape(rows, LANE)          # free relayout (row-major bitcast)

    if rows <= SINGLE_BLOCK_MAX_ROWS:
        # Single invocation, no grid, no pipeline machinery: whole arrays in VMEM.
        y_flat = pl.pallas_call(
            _pe_add_whole_kernel,
            out_shape=jax.ShapeDtypeStruct((rows, LANE), x.dtype),
            in_specs=[
                pl.BlockSpec(memory_space=pltpu.MemorySpace.VMEM),   # x slab
                pl.BlockSpec(memory_space=pltpu.MemorySpace.VMEM),   # full flat pe
            ],
            out_specs=pl.BlockSpec(memory_space=pltpu.MemorySpace.VMEM),
            input_output_aliases={0: 0},    # x += pe: reuse x's HBM buffer
        )(x_flat, pe_flat)
    else:
        # Realistic sizes: tile over rows with a lane-dense block.  The pe
        # BlockSpec selects exactly the needed rows from HBM per step.
        tile = min(TILE_ROWS, rows)
        grid = (pl.cdiv(rows, tile),)
        y_flat = pl.pallas_call(
            _pe_add_tile_kernel,
            out_shape=jax.ShapeDtypeStruct((rows, LANE), x.dtype),
            grid=grid,
            in_specs=[
                pl.BlockSpec((tile, LANE), lambda i: (i, 0)),   # x tile
                pl.BlockSpec((tile, LANE), lambda i: (i, 0)),   # matching pe rows
            ],
            out_specs=pl.BlockSpec((tile, LANE), lambda i: (i, 0)),
            input_output_aliases={0: 0},
            compiler_params=pltpu.CompilerParams(
                # "parallel": lets v7x's 2 TensorCores split this mem-bound add.
                dimension_semantics=("parallel",)),
        )(x_flat, pe_flat)

    return y_flat.reshape(T, B, E)


# ---------------------------------------------------------------------------
# Demo / correctness check
# ---------------------------------------------------------------------------
if __name__ == "__main__":
    key = jax.random.PRNGKey(0)
    k_small, k_large = jax.random.split(key)

    # register_buffer('pe', ...) equivalent.
    pe = make_pe_table(MAX_LEN, D_MODEL)

    # Small, module-consistent shapes: seq=8, batch=2, hidden=32.
    T, B = 8, 2
    assert T <= MAX_LEN
    x = jax.random.normal(k_small, (T, B, D_MODEL), jnp.float32)
    pe_flat = flatten_pe_for_batch(pe, B)            # once, at "module init"

    y = positional_encoding(x, pe_flat)
    jax.block_until_ready(y)
    assert y.shape == (T, B, D_MODEL)
    assert jnp.allclose(y, x + pe[:T], atol=1e-6)    # dropout identity in eval mode

    # Larger run to exercise the tiled ("parallel") path as well.
    T2, B2 = MAX_LEN, 64
    x2 = jax.random.normal(k_large, (T2, B2, D_MODEL), jnp.float32)
    pe_flat2 = flatten_pe_for_batch(pe, B2)
    y2 = positional_encoding(x2, pe_flat2)
    jax.block_until_ready(y2)
    assert jnp.allclose(y2, x2 + pe[:T2], atol=1e-6)

    print("KERNEL_OK")
</pallas_src>

<mosaic_0001>
module attributes {stable_mosaic.version = 11 : i64} {
  func.func @_pe_add_whole_kernel(%arg0: memref<4x128xf32, #tpu.memory_space<vmem>>, %arg1: memref<32x128xf32, #tpu.memory_space<vmem>>, %arg2: memref<4x128xf32, #tpu.memory_space<vmem>>) attributes {dimension_semantics = [], scalar_prefetch = 0 : i64, scratch_operands = 0 : i64, tpu.core_type = #tpu.core_type<tc>} {
    %c0 = arith.constant 0 : index
    %c0_0 = arith.constant 0 : index
    %0 = vector.load %arg0[%c0, %c0_0] : memref<4x128xf32, #tpu.memory_space<vmem>>, vector<4x128xf32>
    %c0_1 = arith.constant 0 : index
    %c0_2 = arith.constant 0 : index
    %1 = vector.load %arg1[%c0_1, %c0_2] : memref<32x128xf32, #tpu.memory_space<vmem>>, vector<4x128xf32>
    %2 = arith.addf %0, %1 : vector<4x128xf32>
    %c0_3 = arith.constant 0 : index
    %c0_4 = arith.constant 0 : index
    %3 = vector.load %arg2[%c0_3, %c0_4] : memref<4x128xf32, #tpu.memory_space<vmem>>, vector<4x128xf32>
    tpu.vector_store %arg2[%c0_3, %c0_4], %2 {strides = array<i32>} : memref<4x128xf32, #tpu.memory_space<vmem>>, vector<4x128xf32>,
    return
  }
}

</mosaic_0001>

<llo_original>
// kernel: positional_encoding.1
$region0: #{positional_encoding.1}
  #allocation0 [shape = 'u32[]', space=smem, size = 0x4, offset = 0x4, fixed_abs, tag = 'smem constant byte address 0x4 - core index']
  #allocation1 [shape = 'u32[144,128]{1,0:T(1,128)}', space=vmem, size = 0x12000, scoped, tag = 'internal scratch']
  %s0 = inlined_call_operand.vmem [shape: f32[4,128], index: 0, kind: input, shape index: {}, may-alias: {0,2}]
  %s1 = inlined_call_operand.hbm [shape: f32[32,128], index: 1, kind: input, shape index: {}]
  %s2 = inlined_call_operand.vmem [shape: f32[4,128], index: 2, kind: output, shape index: {}, may-alias: {0,2}]
  %s3 = sld [smem:[#allocation0]]
  $region22: #{positional_encoding.1} parent=0
    _
  %s5 = ssub.s32 1, %s3
  %s6 = scalar_select 0, %s5, %s3
  $region1: #{positional_encoding.1} parent=0
    #allocation2 [shape = 'u8[16384]{0}', space=vmem, size = 0x4000, scoped, tag = 'input window, operand 1, single buffered']
    #allocation3 [shape = 's32[1]{0}', space=sflag, size = 0x4, scoped, tag = 'scoped memory for positional_encoding.1']
    %7 = vsyncpa [#allocation3], 0
    // Predicated region
    $region2: #{positional_encoding.1} parent=1 // pred_check
      _
    $region3: #{positional_encoding.1} parent=1 // pred_check_branch
      %9 = sbr.rel (0) target = $region5
    $region4: #{positional_encoding.1} parent=1 // pred_region
      _
    $region5: #{positional_encoding.1} parent=1 // pred_fallthru
      _
    // Predicated region
    $region6: #{positional_encoding.1} parent=1 // pred_check
      _
    $region7: #{positional_encoding.1} parent=1 // pred_check_branch
      %11 = sbr.rel (0) target = $region9
    $region8: #{positional_encoding.1} parent=1 // pred_region
      %s13 = ssub.s32 512, 512
      %14 = vsyncadd [#allocation3], %s13
      %s15 = sshll.u32 [#allocation2], 4
      %s16 = int_to_ptr.vmem [resolvable:$true] %s15
      %21 = dma.hbm_to_vmem [thread:$0]  %s1, 512, %s16, [#allocation3], 128, 128, 8
    $region9: #{positional_encoding.1} parent=1 // pred_fallthru
      _
    // Predicated region
    $region10: #{positional_encoding.1} parent=1 // pred_check
      _
    $region11: #{positional_encoding.1} parent=1 // pred_check_branch
      %23 = sbr.rel (0) target = $region13
    $region12: #{positional_encoding.1} parent=1 // pred_region
      %24 = dma.done [#allocation3], 512
    $region13: #{positional_encoding.1} parent=1 // pred_fallthru
      _
    %v25 = vld [vmem:[%s0] sm:$0xf]
    %v26 = vld [vmem:[#allocation2] sm:$0xf]
    %v27 = vadd.f32 %v25, %v26
    %28 = vst [vmem:[%s2] sm:$0xf] %v27
    // Predicated region
    $region14: #{positional_encoding.1} parent=1 // pred_check
      _
    $region15: #{positional_encoding.1} parent=1 // pred_check_branch
      %30 = sbr.rel (0) target = $region17
    $region16: #{positional_encoding.1} parent=1 // pred_region
      _
    $region17: #{positional_encoding.1} parent=1 // pred_fallthru
      _
    // Predicated region
    $region18: #{positional_encoding.1} parent=1 // pred_check
      _
    $region19: #{positional_encoding.1} parent=1 // pred_check_branch
      %32 = sbr.rel (0) target = $region21
    $region20: #{positional_encoding.1} parent=1 // pred_region
      _
    $region21: #{positional_encoding.1} parent=1 // pred_fallthru
      _
    %33 = vsyncpa [#allocation3], 1

</llo_original>
